<compile_context>
chip_gen: v7x
topology: tpu7x:2x2x1
jax: 0.10.0
libtpu: 0.0.40
codegen_flags: <defaults>
</compile_context>

<pallas_src>
import numpy as np
import jax
import jax.numpy as jnp
from jax.experimental import pallas as pl
from jax.experimental.pallas import tpu as pltpu

EPS = 1e-5
C1, C2 = 16, 32   # channel widths fixed by the module (Conv2d(1,16), Conv2d(16,32))


# ---------------- fused Pallas kernel ----------------

def _cnn_fused_kernel(xpad_ref, a1_ref, sh1_ref, a2_ref, sh2_ref,
                      fc1w_ref, fc1b_ref, fc2w_ref, fc2b_ref, o_ref):
    BB, Hp2, Wp2 = xpad_ref.shape
    H = Hp2 - 2
    L1 = sh1_ref.shape[1]            # W2 * C1  (= 128 for W = 16)
    L2 = sh2_ref.shape[1]            # W2 * C2  (= 256 for W = 16)
    R = BB * H                       # one row per (image, h)

    # ---- conv1 + BN1 as ONE banded matmul (K = 3*(W+2)) ------------------------
    # lhs1 row (b,h) = [xpad[b,h+0,:], xpad[b,h+1,:], xpad[b,h+2,:]] (3 vertical taps)
    xpad = xpad_ref[...]
    lhs1 = jnp.concatenate(
        [xpad[:, dy:dy + H, :].reshape(R, Wp2) for dy in range(3)],
        axis=1).astype(jnp.bfloat16)                                      # (R, 3*(W+2))
    z1 = jnp.dot(lhs1, a1_ref[...], preferred_element_type=jnp.float32)   # (R, 2*L1)

    # ---- MaxPool2d((1,2)) fused into the epilogue ------------------------------
    # a1's output columns are ordered (w%2, w//2, c): first L1 lanes = even w,
    # last L1 lanes = odd w -> pool is one max of two 128-lane halves.
    # relu(max(a,b) + s) == max(relu(a+s), relu(b+s))   (monotone epilogue)
    y2 = jnp.maximum(jnp.maximum(z1[:, :L1], z1[:, L1:]) + sh1_ref[...], 0.0)  # (R, L1)

    # ---- conv2 + BN2 as ONE banded matmul (K = 3*L1) ----------------------------
    # Vertical taps: zero row above/below each image, then three sublane slices
    # (lane-dense; no channel-last padded scratch / masked interior stores).
    zrow = jnp.zeros((BB, 1, L1), jnp.float32)
    y2p = jnp.concatenate([zrow, y2.reshape(BB, H, L1), zrow], axis=1)    # (BB, H+2, L1)
    lhs2 = jnp.concatenate(
        [y2p[:, dy:dy + H, :].reshape(R, L1) for dy in range(3)],
        axis=1).astype(jnp.bfloat16)                                       # (R, 3*L1)
    z2 = jnp.dot(lhs2, a2_ref[...], preferred_element_type=jnp.float32)    # (R, L2)
    y3 = jnp.maximum(z2 + sh2_ref[...], 0.0)                               # (R, L2)

    # ---- AdaptiveAvgPool2d((2,2)) + flatten + FC1 + ReLU -------------------------
    # h-halves: two sublane reductions; w-halves, 1/area and the NCHW flatten order
    # are all folded into fc1w (wrapper), so FC1 is one K = 2*L2 matmul.
    y3r = y3.reshape(BB, H, L2)
    top = jnp.sum(y3r[:, :H // 2, :], axis=1)                              # (BB, L2)
    bot = jnp.sum(y3r[:, H // 2:, :], axis=1)                              # (BB, L2)
    yh = jnp.concatenate([top, bot], axis=1).astype(jnp.bfloat16)          # (BB, 2*L2)
    h1 = jnp.maximum(
        jnp.dot(yh, fc1w_ref[...], preferred_element_type=jnp.float32)
        + fc1b_ref[...], 0.0)                                              # (BB, 64)

    # ---- FC2 (output padded to 128 lanes -> unmasked store) ---------------------
    # TODO(synk): Dropout(0.4) is identity in eval mode; train-mode RNG masking not implemented.
    o_ref[...] = (jnp.dot(h1.astype(jnp.bfloat16), fc2w_ref[...],
                          preferred_element_type=jnp.float32) + fc2b_ref[...])


# ---------------- wrapper ----------------

def cnn_forward(params, x_nchw):
    B, Cin, H, W = x_nchw.shape
    assert Cin == 1, "module is Conv2d(1, 16, ...)"
    assert H % 8 == 0 and W % 4 == 0, "kernel assumes sublane-aligned H and even pooled width"
    W2 = W // 2
    out_dim = params["fc2_w"].shape[0]
    assert out_dim <= 128

    # batch tiling: BB images per grid step (pad batch if needed)
    BB = B if B <= 8 else 8
    Bp = ((B + BB - 1) // BB) * BB

    x = x_nchw.reshape(B, H, W)                       # Cin == 1: drop channel, no transpose
    if Bp != B:
        x = jnp.pad(x, ((0, Bp - B), (0, 0), (0, 0)))
    xpad = jnp.pad(x, ((0, 0), (1, 1), (1, 1)))       # zero pad once for both convs

    # ---- fold BN into conv weights; build banded matmul operands (O(1) in batch) ----
    s1 = params["bn1_gamma"] / jnp.sqrt(params["bn1_var"] + EPS)
    s2 = params["bn2_gamma"] / jnp.sqrt(params["bn2_var"] + EPS)
    sh1 = (params["b1"] - params["bn1_mean"]) * s1 + params["bn1_beta"]        # (C1,)
    sh2 = (params["b2"] - params["bn2_mean"]) * s2 + params["bn2_beta"]        # (C2,)

    # conv1 banded weight: rows = dy*(W+2) + j, cols = (w%2)*W2*C1 + (w//2)*C1 + c
    w1s = jnp.transpose(params["w1"][:, 0, :, :], (1, 2, 0)) * s1[None, None, :]   # (3,3,C1) [dy,dx,c]
    bnd1 = np.zeros((3, W + 2, 2, W2), np.float32)        # [dx, j, par, wp]: j == 2*wp+par+dx
    for dx in range(3):
        for par in range(2):
            for wp in range(W2):
                bnd1[dx, 2 * wp + par + dx, par, wp] = 1.0
    a1 = jnp.einsum("xjpq,yxc->yjpqc", jnp.asarray(bnd1), w1s).reshape(3 * (W + 2), 2 * W2 * C1)

    # conv2 banded weight: rows = dy*W2*C1 + wq*C1 + ci, cols = wp*C2 + co
    w2s = jnp.transpose(params["w2"], (2, 3, 1, 0)) * s2[None, None, None, :]  # (3,3,C1,C2) [dy,dx,ci,co]
    bnd2 = np.zeros((3, W2, W2), np.float32)              # [dx, wq, wp]: wq == wp+dx-1
    for dx in range(3):
        for wp in range(W2):
            wq = wp + dx - 1
            if 0 <= wq < W2:
                bnd2[dx, wq, wp] = 1.0
    a2 = jnp.einsum("xqp,yxio->yqipo", jnp.asarray(bnd2), w2s).reshape(3 * W2 * C1, W2 * C2)

    sh1_cols = jnp.tile(sh1, W2)[None, :]                 # (1, W2*C1): col = wp*C1 + c
    sh2_cols = jnp.tile(sh2, W2)[None, :]                 # (1, W2*C2): col = wp*C2 + co

    # AdaptiveAvgPool(2,2) w-halves + 1/area + NCHW flatten permutation folded into FC1
    area = (H // 2) * (W2 // 2)
    fw = params["fc1_w"].reshape(64, C2, 2, 2)            # [j, c, hh, ww]
    sel = np.zeros((W2, 2), np.float32)                   # [wp, ww]: ww == wp // (W2//2)
    for wp in range(W2):
        sel[wp, wp // (W2 // 2)] = 1.0
    fc1w = (jnp.einsum("pw,jchw->hpcj", jnp.asarray(sel), fw) / area
            ).reshape(2 * W2 * C2, 64)                    # rows match yh column order
    fc1b = params["fc1_b"][None, :]

    # FC2 padded to 128 output lanes (unmasked store); sliced back after the call
    fc2w = jnp.zeros((64, 128), jnp.float32).at[:, :out_dim].set(params["fc2_w"].T)
    fc2b = jnp.zeros((1, 128), jnp.float32).at[0, :out_dim].set(params["fc2_b"])

    # bf16 matmul operands (kernel accumulates in f32)
    a1b = a1.astype(jnp.bfloat16)
    a2b = a2.astype(jnp.bfloat16)
    fc1wb = fc1w.astype(jnp.bfloat16)
    fc2wb = fc2w.astype(jnp.bfloat16)

    grid = (Bp // BB,)
    flops = (2 * Bp * H * (3 * (W + 2) * 2 * W2 * C1 + 3 * W2 * C1 * W2 * C2)
             + 2 * Bp * (2 * W2 * C2 * 64 + 64 * 128))
    bytes_acc = (Bp * (H + 2) * (W + 2) * 4 + Bp * 128 * 4
                 + 2 * (3 * (W + 2) * 2 * W2 * C1 + 3 * W2 * C1 * W2 * C2
                        + 2 * W2 * C2 * 64 + 64 * 128))

    out = pl.pallas_call(
        _cnn_fused_kernel,
        out_shape=jax.ShapeDtypeStruct((Bp, 128), jnp.float32),
        grid_spec=pltpu.PrefetchScalarGridSpec(
            num_scalar_prefetch=0,
            grid=grid,
            in_specs=[
                pl.BlockSpec((BB, H + 2, W + 2), lambda i: (i, 0, 0)),       # input (per step)
                pl.BlockSpec((3 * (W + 2), 2 * W2 * C1), lambda i: (0, 0)),  # a1 (resident)
                pl.BlockSpec((1, W2 * C1), lambda i: (0, 0)),                # sh1
                pl.BlockSpec((3 * W2 * C1, W2 * C2), lambda i: (0, 0)),      # a2
                pl.BlockSpec((1, W2 * C2), lambda i: (0, 0)),                # sh2
                pl.BlockSpec((2 * W2 * C2, 64), lambda i: (0, 0)),           # fc1 w
                pl.BlockSpec((1, 64), lambda i: (0, 0)),                     # fc1 b
                pl.BlockSpec((64, 128), lambda i: (0, 0)),                   # fc2 w (padded)
                pl.BlockSpec((1, 128), lambda i: (0, 0)),                    # fc2 b (padded)
            ],
            out_specs=pl.BlockSpec((BB, 128), lambda i: (i, 0)),
        ),
        compiler_params=pltpu.CompilerParams(dimension_semantics=("parallel",)),
        cost_estimate=pl.CostEstimate(flops=int(flops), transcendentals=0,
                                      bytes_accessed=int(bytes_acc)),
    )(xpad, a1b, sh1_cols, a2b, sh2_cols, fc1wb, fc1b, fc2wb, fc2b)

    return out[:B, :out_dim]


# ---------------- deterministic synthetic params ----------------

def make_params(key, output_dim=4):
    ks = jax.random.split(key, 16)
    rn = lambda k, s, sc=0.1: (jax.random.normal(k, s) * sc).astype(jnp.float32)
    return {
        "w1": rn(ks[0], (16, 1, 3, 3), 0.3), "b1": rn(ks[1], (16,)),
        "bn1_gamma": 1.0 + rn(ks[2], (16,)), "bn1_beta": rn(ks[3], (16,)),
        "bn1_mean": rn(ks[4], (16,)), "bn1_var": 1.0 + jnp.abs(rn(ks[5], (16,))),
        "w2": rn(ks[6], (32, 16, 3, 3), 0.1), "b2": rn(ks[7], (32,)),
        "bn2_gamma": 1.0 + rn(ks[8], (32,)), "bn2_beta": rn(ks[9], (32,)),
        "bn2_mean": rn(ks[10], (32,)), "bn2_var": 1.0 + jnp.abs(rn(ks[11], (32,))),
        "fc1_w": rn(ks[12], (64, 128), 0.1), "fc1_b": rn(ks[13], (64,)),
        "fc2_w": rn(ks[14], (output_dim, 64), 0.1), "fc2_b": rn(ks[15], (output_dim,)),
    }


# ---------------- pure-JAX reference (correctness check) ----------------

def cnn_forward_ref(params, x_nchw):
    x = jnp.transpose(x_nchw, (0, 2, 3, 1))

    def conv(x, w, b):
        wt = jnp.transpose(w, (2, 3, 1, 0))  # HWIO
        return jax.lax.conv_general_dilated(
            x, wt, (1, 1), "SAME",
            dimension_numbers=("NHWC", "HWIO", "NHWC")) + b

    def bn(x, g, be, m, v):
        return (x - m) / jnp.sqrt(v + EPS) * g + be

    y = jax.nn.relu(bn(conv(x, params["w1"], params["b1"]),
                       params["bn1_gamma"], params["bn1_beta"],
                       params["bn1_mean"], params["bn1_var"]))
    B, H, W, _ = y.shape
    y = y.reshape(B, H, W // 2, 2, 16).max(axis=3)
    y = jax.nn.relu(bn(conv(y, params["w2"], params["b2"]),
                       params["bn2_gamma"], params["bn2_beta"],
                       params["bn2_mean"], params["bn2_var"]))
    W2 = W // 2
    y = y.reshape(B, 2, H // 2, 2, W2 // 2, 32).mean(axis=(2, 4))
    flat = jnp.transpose(y, (0, 3, 1, 2)).reshape(B, -1)
    h = jax.nn.relu(flat @ params["fc1_w"].T + params["fc1_b"])
    return h @ params["fc2_w"].T + params["fc2_b"]


if __name__ == "__main__":
    key = jax.random.PRNGKey(0)
    pkey, xkey = jax.random.split(key)
    params = make_params(pkey, output_dim=4)
    # input matches nn.Conv2d(1, 16, ...): NCHW, 1 channel
    x = jax.random.normal(xkey, (2, 1, 16, 16), dtype=jnp.float32)

    fwd = jax.jit(cnn_forward)
    out = jax.block_until_ready(fwd(params, x))
    ref = jax.block_until_ready(cnn_forward_ref(params, x))

    assert out.shape == (2, 4), out.shape
    # tolerance reflects bf16 MXU operands (f32 accumulation)
    np.testing.assert_allclose(np.asarray(out), np.asarray(ref), rtol=3e-2, atol=3e-2)
    print("KERNEL_OK")
</pallas_src>

<mosaic_0001>
module attributes {stable_mosaic.version = 11 : i64} {
  func.func @_cnn_fused_kernel(%arg0: i32, %arg1: memref<2x18x18xf32, #tpu.memory_space<vmem>>, %arg2: memref<54x256xbf16, #tpu.memory_space<vmem>>, %arg3: memref<1x128xf32, #tpu.memory_space<vmem>>, %arg4: memref<384x256xbf16, #tpu.memory_space<vmem>>, %arg5: memref<1x256xf32, #tpu.memory_space<vmem>>, %arg6: memref<512x64xbf16, #tpu.memory_space<vmem>>, %arg7: memref<1x64xf32, #tpu.memory_space<vmem>>, %arg8: memref<64x128xbf16, #tpu.memory_space<vmem>>, %arg9: memref<1x128xf32, #tpu.memory_space<vmem>>, %arg10: memref<2x128xf32, #tpu.memory_space<vmem>>) attributes {dimension_semantics = [#tpu.dimension_semantics<parallel>], iteration_bounds = array<i64: 1>, scalar_prefetch = 0 : i64, scratch_operands = 0 : i64, tpu.core_type = #tpu.core_type<tc>, window_params = [{transform_indices = @transform_0, window_bounds = array<i64: 2, 18, 18>}, {pipeline_mode = #tpu.pipeline_mode<synchronous>, transform_indices = @transform_1, window_bounds = array<i64: 54, 256>}, {pipeline_mode = #tpu.pipeline_mode<synchronous>, transform_indices = @transform_2, window_bounds = array<i64: 1, 128>}, {pipeline_mode = #tpu.pipeline_mode<synchronous>, transform_indices = @transform_3, window_bounds = array<i64: 384, 256>}, {pipeline_mode = #tpu.pipeline_mode<synchronous>, transform_indices = @transform_4, window_bounds = array<i64: 1, 256>}, {pipeline_mode = #tpu.pipeline_mode<synchronous>, transform_indices = @transform_5, window_bounds = array<i64: 512, 64>}, {pipeline_mode = #tpu.pipeline_mode<synchronous>, transform_indices = @transform_6, window_bounds = array<i64: 1, 64>}, {pipeline_mode = #tpu.pipeline_mode<synchronous>, transform_indices = @transform_7, window_bounds = array<i64: 64, 128>}, {pipeline_mode = #tpu.pipeline_mode<synchronous>, transform_indices = @transform_8, window_bounds = array<i64: 1, 128>}, {transform_indices = @transform_9, window_bounds = array<i64: 2, 128>}]} {
    %c0 = arith.constant 0 : index
    %c0_0 = arith.constant 0 : index
    %c0_1 = arith.constant 0 : index
    %0 = vector.load %arg1[%c0, %c0_0, %c0_1] : memref<2x18x18xf32, #tpu.memory_space<vmem>>, vector<2x18x18xf32>
    %1 = vector.extract_strided_slice %0 {offsets = [0, 0, 0], sizes = [2, 16, 18], strides = [1, 1, 1]} : vector<2x18x18xf32> to vector<2x16x18xf32>
    %2 = vector.shape_cast %1 : vector<2x16x18xf32> to vector<32x18xf32>
    %3 = vector.extract_strided_slice %0 {offsets = [0, 1, 0], sizes = [2, 16, 18], strides = [1, 1, 1]} : vector<2x18x18xf32> to vector<2x16x18xf32>
    %4 = vector.shape_cast %3 : vector<2x16x18xf32> to vector<32x18xf32>
    %5 = vector.extract_strided_slice %0 {offsets = [0, 2, 0], sizes = [2, 16, 18], strides = [1, 1, 1]} : vector<2x18x18xf32> to vector<2x16x18xf32>
    %6 = vector.shape_cast %5 : vector<2x16x18xf32> to vector<32x18xf32>
    %7 = tpu.concatenate %2, %4, %6 in 1 : vector<32x18xf32>, vector<32x18xf32>, vector<32x18xf32> -> vector<32x54xf32>
    %8 = arith.truncf %7 : vector<32x54xf32> to vector<32x54xbf16>
    %c0_2 = arith.constant 0 : index
    %c0_3 = arith.constant 0 : index
    %9 = vector.load %arg2[%c0_2, %c0_3] : memref<54x256xbf16, #tpu.memory_space<vmem>>, vector<54x256xbf16>
    %cst = arith.constant dense<0.000000e+00> : vector<32x256xf32>
    %10 = tpu.matmul %8, %9, %cst {dimension_numbers = #tpu.dot_dimension_numbers<[1], [0], [0], [1], [0, 0, 1, 1], [], []>} : vector<32x54xbf16>, vector<54x256xbf16>, vector<32x256xf32> -> vector<32x256xf32>
    %11 = vector.extract_strided_slice %10 {offsets = [0, 0], sizes = [32, 128], strides = [1, 1]} : vector<32x256xf32> to vector<32x128xf32>
    %12 = vector.extract_strided_slice %10 {offsets = [0, 128], sizes = [32, 128], strides = [1, 1]} : vector<32x256xf32> to vector<32x128xf32>
    %13 = arith.maximumf %11, %12 : vector<32x128xf32>
    %c0_4 = arith.constant 0 : index
    %c0_5 = arith.constant 0 : index
    %14 = vector.load %arg3[%c0_4, %c0_5] : memref<1x128xf32, #tpu.memory_space<vmem>>, vector<1x128xf32>
    %15 = vector.broadcast %14 : vector<1x128xf32> to vector<32x128xf32>
    %16 = arith.addf %13, %15 : vector<32x128xf32>
    %cst_6 = arith.constant 0.000000e+00 : f32
    %17 = vector.broadcast %cst_6 : f32 to vector<32x128xf32>
    %18 = arith.maximumf %16, %17 : vector<32x128xf32>
    %cst_7 = arith.constant 0.000000e+00 : f32
    %19 = vector.broadcast %cst_7 : f32 to vector<2x1x128xf32>
    %20 = vector.shape_cast %18 : vector<32x128xf32> to vector<2x16x128xf32>
    %21 = tpu.concatenate %19, %20, %19 in 1 : vector<2x1x128xf32>, vector<2x16x128xf32>, vector<2x1x128xf32> -> vector<2x18x128xf32>
    %22 = vector.extract_strided_slice %21 {offsets = [0, 0, 0], sizes = [2, 16, 128], strides = [1, 1, 1]} : vector<2x18x128xf32> to vector<2x16x128xf32>
    %23 = vector.shape_cast %22 : vector<2x16x128xf32> to vector<32x128xf32>
    %24 = vector.extract_strided_slice %21 {offsets = [0, 1, 0], sizes = [2, 16, 128], strides = [1, 1, 1]} : vector<2x18x128xf32> to vector<2x16x128xf32>
    %25 = vector.shape_cast %24 : vector<2x16x128xf32> to vector<32x128xf32>
    %26 = vector.extract_strided_slice %21 {offsets = [0, 2, 0], sizes = [2, 16, 128], strides = [1, 1, 1]} : vector<2x18x128xf32> to vector<2x16x128xf32>
    %27 = vector.shape_cast %26 : vector<2x16x128xf32> to vector<32x128xf32>
    %28 = tpu.concatenate %23, %25, %27 in 1 : vector<32x128xf32>, vector<32x128xf32>, vector<32x128xf32> -> vector<32x384xf32>
    %29 = arith.truncf %28 : vector<32x384xf32> to vector<32x384xbf16>
    %c0_8 = arith.constant 0 : index
    %c0_9 = arith.constant 0 : index
    %30 = vector.load %arg4[%c0_8, %c0_9] : memref<384x256xbf16, #tpu.memory_space<vmem>>, vector<384x256xbf16>
    %cst_10 = arith.constant dense<0.000000e+00> : vector<32x256xf32>
    %31 = tpu.matmul %29, %30, %cst_10 {dimension_numbers = #tpu.dot_dimension_numbers<[1], [0], [0], [1], [0, 0, 1, 1], [], []>} : vector<32x384xbf16>, vector<384x256xbf16>, vector<32x256xf32> -> vector<32x256xf32>
    %c0_11 = arith.constant 0 : index
    %c0_12 = arith.constant 0 : index
    %32 = vector.load %arg5[%c0_11, %c0_12] : memref<1x256xf32, #tpu.memory_space<vmem>>, vector<1x256xf32>
    %33 = vector.broadcast %32 : vector<1x256xf32> to vector<32x256xf32>
    %34 = arith.addf %31, %33 : vector<32x256xf32>
    %cst_13 = arith.constant 0.000000e+00 : f32
    %35 = vector.broadcast %cst_13 : f32 to vector<32x256xf32>
    %36 = arith.maximumf %34, %35 : vector<32x256xf32>
    %37 = vector.shape_cast %36 : vector<32x256xf32> to vector<2x16x256xf32>
    %38 = vector.extract_strided_slice %37 {offsets = [0, 0, 0], sizes = [2, 8, 256], strides = [1, 1, 1]} : vector<2x16x256xf32> to vector<2x8x256xf32>
    %cst_14 = arith.constant dense<0.000000e+00> : vector<2x256xf32>
    %39 = vector.multi_reduction <add>, %38, %cst_14 [1] : vector<2x8x256xf32> to vector<2x256xf32>
    %40 = vector.extract_strided_slice %37 {offsets = [0, 8, 0], sizes = [2, 8, 256], strides = [1, 1, 1]} : vector<2x16x256xf32> to vector<2x8x256xf32>
    %cst_15 = arith.constant dense<0.000000e+00> : vector<2x256xf32>
    %41 = vector.multi_reduction <add>, %40, %cst_15 [1] : vector<2x8x256xf32> to vector<2x256xf32>
    %42 = tpu.concatenate %39, %41 in 1 : vector<2x256xf32>, vector<2x256xf32> -> vector<2x512xf32>
    %43 = arith.truncf %42 : vector<2x512xf32> to vector<2x512xbf16>
    %c0_16 = arith.constant 0 : index
    %c0_17 = arith.constant 0 : index
    %44 = vector.load %arg6[%c0_16, %c0_17] : memref<512x64xbf16, #tpu.memory_space<vmem>>, vector<512x64xbf16>
    %cst_18 = arith.constant dense<0.000000e+00> : vector<2x64xf32>
    %45 = tpu.matmul %43, %44, %cst_18 {dimension_numbers = #tpu.dot_dimension_numbers<[1], [0], [0], [1], [0, 0, 1, 1], [], []>} : vector<2x512xbf16>, vector<512x64xbf16>, vector<2x64xf32> -> vector<2x64xf32>
    %c0_19 = arith.constant 0 : index
    %c0_20 = arith.constant 0 : index
    %46 = vector.load %arg7[%c0_19, %c0_20] : memref<1x64xf32, #tpu.memory_space<vmem>>, vector<1x64xf32>
    %47 = vector.broadcast %46 : vector<1x64xf32> to vector<2x64xf32>
    %48 = arith.addf %45, %47 : vector<2x64xf32>
    %cst_21 = arith.constant 0.000000e+00 : f32
    %49 = vector.broadcast %cst_21 : f32 to vector<2x64xf32>
    %50 = arith.maximumf %48, %49 : vector<2x64xf32>
    %51 = arith.truncf %50 : vector<2x64xf32> to vector<2x64xbf16>
    %c0_22 = arith.constant 0 : index
    %c0_23 = arith.constant 0 : index
    %52 = vector.load %arg8[%c0_22, %c0_23] : memref<64x128xbf16, #tpu.memory_space<vmem>>, vector<64x128xbf16>
    %cst_24 = arith.constant dense<0.000000e+00> : vector<2x128xf32>
    %53 = tpu.matmul %51, %52, %cst_24 {dimension_numbers = #tpu.dot_dimension_numbers<[1], [0], [0], [1], [0, 0, 1, 1], [], []>} : vector<2x64xbf16>, vector<64x128xbf16>, vector<2x128xf32> -> vector<2x128xf32>
    %c0_25 = arith.constant 0 : index
    %c0_26 = arith.constant 0 : index
    %54 = vector.load %arg9[%c0_25, %c0_26] : memref<1x128xf32, #tpu.memory_space<vmem>>, vector<1x128xf32>
    %55 = vector.broadcast %54 : vector<1x128xf32> to vector<2x128xf32>
    %56 = arith.addf %53, %55 : vector<2x128xf32>
    %c0_27 = arith.constant 0 : index
    %c0_28 = arith.constant 0 : index
    %57 = vector.load %arg10[%c0_27, %c0_28] : memref<2x128xf32, #tpu.memory_space<vmem>>, vector<2x128xf32>
    tpu.vector_store %arg10[%c0_27, %c0_28], %56 {strides = array<i32>} : memref<2x128xf32, #tpu.memory_space<vmem>>, vector<2x128xf32>,
    return
  }
  func.func @transform_0(%arg0: i32) -> (i32, i32, i32) {
    %c0_i32 = arith.constant 0 : i32
    %c0_i32_0 = arith.constant 0 : i32
    %c0_i32_1 = arith.constant 0 : i32
    return %arg0, %c0_i32, %c0_i32_0 : i32, i32, i32
  }
  func.func @transform_1(%arg0: i32) -> (i32, i32) {
    %c0_i32 = arith.constant 0 : i32
    %c0_i32_0 = arith.constant 0 : i32
    %c0_i32_1 = arith.constant 0 : i32
    return %c0_i32, %c0_i32_0 : i32, i32
  }
  func.func @transform_2(%arg0: i32) -> (i32, i32) {
    %c0_i32 = arith.constant 0 : i32
    %c0_i32_0 = arith.constant 0 : i32
    %c0_i32_1 = arith.constant 0 : i32
    return %c0_i32, %c0_i32_0 : i32, i32
  }
  func.func @transform_3(%arg0: i32) -> (i32, i32) {
    %c0_i32 = arith.constant 0 : i32
    %c0_i32_0 = arith.constant 0 : i32
    %c0_i32_1 = arith.constant 0 : i32
    return %c0_i32, %c0_i32_0 : i32, i32
  }
  func.func @transform_4(%arg0: i32) -> (i32, i32) {
    %c0_i32 = arith.constant 0 : i32
    %c0_i32_0 = arith.constant 0 : i32
    %c0_i32_1 = arith.constant 0 : i32
    return %c0_i32, %c0_i32_0 : i32, i32
  }
  func.func @transform_5(%arg0: i32) -> (i32, i32) {
    %c0_i32 = arith.constant 0 : i32
    %c0_i32_0 = arith.constant 0 : i32
    %c0_i32_1 = arith.constant 0 : i32
    return %c0_i32, %c0_i32_0 : i32, i32
  }
  func.func @transform_6(%arg0: i32) -> (i32, i32) {
    %c0_i32 = arith.constant 0 : i32
    %c0_i32_0 = arith.constant 0 : i32
    %c0_i32_1 = arith.constant 0 : i32
    return %c0_i32, %c0_i32_0 : i32, i32
  }
  func.func @transform_7(%arg0: i32) -> (i32, i32) {
    %c0_i32 = arith.constant 0 : i32
    %c0_i32_0 = arith.constant 0 : i32
    %c0_i32_1 = arith.constant 0 : i32
    return %c0_i32, %c0_i32_0 : i32, i32
  }
  func.func @transform_8(%arg0: i32) -> (i32, i32) {
    %c0_i32 = arith.constant 0 : i32
    %c0_i32_0 = arith.constant 0 : i32
    %c0_i32_1 = arith.constant 0 : i32
    return %c0_i32, %c0_i32_0 : i32, i32
  }
  func.func @transform_9(%arg0: i32) -> (i32, i32) {
    %c0_i32 = arith.constant 0 : i32
    %c0_i32_0 = arith.constant 0 : i32
    return %arg0, %c0_i32 : i32, i32
  }
}

</mosaic_0001>

<llo_original>
// kernel: tile.18
$region0: #{tile.18}
  #allocation0 [shape = 's32[1]{0}', space=sflag, size = 0x4, scoped, tag = 'scoped memory for tile.18']
  %s0 = inlined_call_operand.vmem [shape: f32[32], index: 0, kind: input, shape index: {}]
  %s1 = inlined_call_operand.vmem [shape: f32[8,32], index: 1, kind: output, shape index: {}]
  // Predicated region
  $region2: #{tile.18} parent=0 // pred_check
    _
  $region3: #{tile.18} parent=0 // pred_check_branch
    %3 = sbr.rel (0) target = $region5
  $region4: #{tile.18} parent=0 // pred_region
    _
  $region5: #{tile.18} parent=0 // pred_fallthru
    _
  %v4 = vld [vmem:[%s0] ss:$0 sm:$0xff]
  %5 = vst [vmem:[%s1] sm:$0xff] %v4

// kernel: tile.19
$region0: #{tile.19}
  %s0 = inlined_call_operand.vmem [shape: f32[8,32], index: 0, kind: input, shape index: {}]
  %s1 = inlined_call_operand.vmem [shape: f32[1,256], index: 1, kind: output, shape index: {}]
  $region1: #{tile.19} parent=0
    #allocation0 [shape = 'u8[8192]{0}', space=vmem, size = 0x2000, scoped, tag = 'scoped mem for output reshape']
    %s2 = smov 3
    %v3 = vld [vmem:[%s0] ss:$4 sm:%s2]
    %vm4 = vcmask 261120
    %5 = vst.msk [vmem:[#allocation0] ss:$8 sm:$0x3] %vm4, %v3
    %s6 = scalar_lea.vmem %s0, 3
    %s7 = smov 3
    %v8 = vld [vmem:[%s6] ss:$4 sm:%s7]
    %9 = vrot.lane.b32.xlu0 %v8, 96
    %v10 = vpop.permute.xlu0 %9
    %vm11 = vcmask 1048320
    %12 = vst.msk [vmem:[#allocation0] ss:$8 sm:$0x3] %vm11, %v10
    %s13 = scalar_lea.vmem %s0, 2
    %s14 = smov 3
    %v15 = vld [vmem:[%s13] ss:$4 sm:%s14]
    %16 = vrot.lane.b32.xlu0 %v15, 64
    %v17 = vpop.permute.xlu0 %16
    %vm18 = vcmask 785920
    %19 = vst.msk [vmem:[#allocation0] ss:$8 sm:$0x3] %vm18, %v17
    %s20 = scalar_lea.vmem %s0, 1
    %s21 = smov 3
    %v22 = vld [vmem:[%s20] ss:$4 sm:%s21]
    %23 = vrot.lane.b32.xlu0 %v22, 32
    %v24 = vpop.permute.xlu0 %23
    %vm25 = vcmask 523520
    %26 = vst.msk [vmem:[#allocation0] ss:$8 sm:$0x3] %vm25, %v24
    %s28 = sshllo.u32 0, 1
    %v30 = vld [vmem:[#allocation0] sm:%s28]
    %s31 = sshllo.u32 0, 1
    %32 = vst [vmem:[%s1] sm:%s31] %v30
    %s33 = scalar_lea.vmem [#allocation0], 8
    %v34 = vld [vmem:[%s33] sm:%s28]
    %s35 = sshllo.u32 0, 1
    %s36 = scalar_lea.vmem %s1, 1
    %37 = vst [vmem:[%s36] sm:%s35] %v34

// kernel: tile.13
$region0: #{tile.13}
  #allocation0 [shape = 's32[1]{0}', space=sflag, size = 0x4, scoped, tag = 'scoped memory for tile.13']
  %s0 = inlined_call_operand.vmem [shape: f32[16], index: 0, kind: input, shape index: {}]
  %s1 = inlined_call_operand.vmem [shape: f32[8,16], index: 1, kind: output, shape index: {}]
  // Predicated region
  $region2: #{tile.13} parent=0 // pred_check
    _
  $region3: #{tile.13} parent=0 // pred_check_branch
    %3 = sbr.rel (0) target = $region5
  $region4: #{tile.13} parent=0 // pred_region
    _
  $region5: #{tile.13} parent=0 // pred_fallthru
    _
  %v4 = vld [vmem:[%s0] ss:$0 sm:$0xff]
  %5 = vst [vmem:[%s1] sm:$0xff] %v4

// kernel: tile.14
$region0: #{tile.14}
  %s0 = inlined_call_operand.vmem [shape: f32[8,16], index: 0, kind: input, shape index: {}]
  %s1 = inlined_call_operand.vmem [shape: f32[1,128], index: 1, kind: output, shape index: {}]
  $region1: #{tile.14} parent=0
    #allocation0 [shape = 'u8[4096]{0}', space=vmem, size = 0x1000, scoped, tag = 'scoped mem for output reshape']
    %v2 = vld [vmem:[%s0] sm:$0x1]
    %vm3 = vcmask 130048
    %4 = vst.msk [vmem:[#allocation0] sm:$0x1] %vm3, %v2
    %s5 = scalar_lea.vmem %s0, 7
    %v6 = vld [vmem:[%s5] sm:$0x1]
    %7 = vrot.lane.b32.xlu0 %v6, 112
    %v8 = vpop.permute.xlu0 %7
    %vm9 = vcmask 1048448
    %10 = vst.msk [vmem:[#allocation0] sm:$0x1] %vm9, %v8
    %s11 = scalar_lea.vmem %s0, 6
    %v12 = vld [vmem:[%s11] sm:$0x1]
    %13 = vrot.lane.b32.xlu0 %v12, 96
    %v14 = vpop.permute.xlu0 %13
    %vm15 = vcmask 917248
    %16 = vst.msk [vmem:[#allocation0] sm:$0x1] %vm15, %v14
    %s17 = scalar_lea.vmem %s0, 5
    %v18 = vld [vmem:[%s17] sm:$0x1]
    %19 = vrot.lane.b32.xlu0 %v18, 80
    %v20 = vpop.permute.xlu0 %19
    %vm21 = vcmask 786048
    %22 = vst.msk [vmem:[#allocation0] sm:$0x1] %vm21, %v20
    %s23 = scalar_lea.vmem %s0, 4
    %v24 = vld [vmem:[%s23] sm:$0x1]
    %25 = vrot.lane.b32.xlu0 %v24, 64
    %v26 = vpop.permute.xlu0 %25
    %vm27 = vcmask 654848
    %28 = vst.msk [vmem:[#allocation0] sm:$0x1] %vm27, %v26
    %s29 = scalar_lea.vmem %s0, 3
    %v30 = vld [vmem:[%s29] sm:$0x1]
    %31 = vrot.lane.b32.xlu0 %v30, 48
    %v32 = vpop.permute.xlu0 %31
    %vm33 = vcmask 523648
    %34 = vst.msk [vmem:[#allocation0] sm:$0x1] %vm33, %v32
    %s35 = scalar_lea.vmem %s0, 2
    %v36 = vld [vmem:[%s35] sm:$0x1]
    %37 = vrot.lane.b32.xlu0 %v36, 32
    %v38 = vpop.permute.xlu0 %37
    %vm39 = vcmask 392448
    %40 = vst.msk [vmem:[#allocation0] sm:$0x1] %vm39, %v38
    %s41 = scalar_lea.vmem %s0, 1
    %v42 = vld [vmem:[%s41] sm:$0x1]
    %43 = vrot.lane.b32.xlu0 %v42, 16
    %v44 = vpop.permute.xlu0 %43
    %vm45 = vcmask 261248
    %46 = vst.msk [vmem:[#allocation0] sm:$0x1] %vm45, %v44
    %s48 = sshllo.u32 0, 1
    %v50 = vld [vmem:[#allocation0] sm:%s48]
    %s51 = sshllo.u32 0, 1
    %52 = vst [vmem:[%s1] sm:%s51] %v50

// kernel: cnn_forward.1
$region0: #{cnn_forward.1}
  #allocation0 [shape = 'u32[]', space=smem, size = 0x4, offset = 0x4, fixed_abs, tag = 'smem constant byte address 0x4 - core index']
  #allocation1 [shape = 'u32[144,128]{1,0:T(1,128)}', space=vmem, size = 0x12000, scoped, tag = 'internal scratch']
  %s0 = inlined_call_operand.vmem [shape: f32[2,18,18], index: 0, kind: input, shape index: {}]
  %s1 = inlined_call_operand.vmem [shape: bf16[54,256], index: 1, kind: input, shape index: {}]
  %s2 = inlined_call_operand.vmem [shape: f32[1,128], index: 2, kind: input, shape index: {}]
  %s3 = inlined_call_operand.vmem [shape: bf16[384,256], index: 3, kind: input, shape index: {}]
  %s4 = inlined_call_operand.vmem [shape: f32[1,256], index: 4, kind: input, shape index: {}]
  %s5 = inlined_call_operand.vmem [shape: bf16[512,64], index: 5, kind: input, shape index: {}]
  %s6 = inlined_call_operand.vmem [shape: f32[1,64], index: 6, kind: input, shape index: {}]
  %s7 = inlined_call_operand.vmem [shape: bf16[64,128], index: 7, kind: input, shape index: {}]
  %s8 = inlined_call_operand.vmem [shape: f32[1,128], index: 8, kind: input, shape index: {}]
  %s9 = inlined_call_operand.hbm [shape: f32[2,128], index: 9, kind: output, shape index: {}]
  %s10 = sld [smem:[#allocation0]]
  $region46: #{cnn_forward.1} parent=0
    _
  %s12 = ssub.s32 1, %s10
  %s13 = scalar_select 0, %s12, %s10
  $region1: #{cnn_forward.1} parent=0
    #allocation2 [shape = 'u8[1024]{0}', space=vmem, size = 0x400, scoped, tag = 'output window, operand 0, single buffered']
    #allocation3 [shape = 's32[1]{0}', space=sflag, size = 0x4, scoped, tag = 'scoped memory for cnn_forward.1']
    %14 = vsyncpa [#allocation3], 0
    // Predicated region
    $region2: #{cnn_forward.1} parent=1 // pred_check
      _
    $region3: #{cnn_forward.1} parent=1 // pred_check_branch
      %16 = sbr.rel (0) target = $region5
    $region4: #{cnn_forward.1} parent=1 // pred_region
      _
    $region5: #{cnn_forward.1} parent=1 // pred_fallthru
      _
    // Predicated region
    $region6: #{cnn_forward.1} parent=1 // pred_check
      _
    $region7: #{cnn_forward.1} parent=1 // pred_check_branch
      %18 = sbr.rel (0) target = $region9
    $region8: #{cnn_forward.1} parent=1 // pred_region
      _
    $region9: #{cnn_forward.1} parent=1 // pred_fallthru
      _
    // Predicated region
    $region10: #{cnn_forward.1} parent=1 // pred_check
      _
    $region11: #{cnn_forward.1} parent=1 // pred_check_branch
      %20 = sbr.rel (0) target = $region13
    $region12: #{cnn_forward.1} parent=1 // pred_region
      _
    $region13: #{cnn_forward.1} parent=1 // pred_fallthru
      _
    // Predicated region
    $region14: #{cnn_forward.1} parent=1 // pred_check
      _
    $region15: #{cnn_forward.1} parent=1 // pred_check_branch
      %22 = sbr.rel (0) target = $region17
    $region16: #{cnn_forward.1} parent=1 // pred_region
      _
    $region17: #{cnn_forward.1} parent=1 // pred_fallthru
      _
    // Predicated region
    $region18: #{cnn_forward.1} parent=1 // pred_check
      _
    $region19: #{cnn_forward.1} parent=1 // pred_check_branch
      %24 = sbr.rel (0) target = $region21
    $region20: #{cnn_forward.1} parent=1 // pred_region
      _
    $region21: #{cnn_forward.1} parent=1 // pred_fallthru
      _
    // Predicated region
    $region22: #{cnn_forward.1} parent=1 // pred_check
      _
    $region23: #{cnn_forward.1} parent=1 // pred_check_branch
      %26 = sbr.rel (0) target = $region25
    $region24: #{cnn_forward.1} parent=1 // pred_region
      _
    $region25: #{cnn_forward.1} parent=1 // pred_fallthru
      _
    // Predicated region
    $region26: #{cnn_forward.1} parent=1 // pred_check
      _
    $region27: #{cnn_forward.1} parent=1 // pred_check_branch
      %28 = sbr.rel (0) target = $region29
    $region28: #{cnn_forward.1} parent=1 // pred_region
      _
    $region29: #{cnn_forward.1} parent=1 // pred_fallthru
      _
    // Predicated region
    $region30: #{cnn_forward.1} parent=1 // pred_check
      _
    $region31: #{cnn_forward.1} parent=1 // pred_check_branch
      %30 = sbr.rel (0) target = $region33
    $region32: #{cnn_forward.1} parent=1 // pred_region
      _
    $region33: #{cnn_forward.1} parent=1 // pred_fallthru
      _
    // Predicated region
    $region34: #{cnn_forward.1} parent=1 // pred_check
      _
    $region35: #{cnn_forward.1} parent=1 // pred_check_branch
      %32 = sbr.rel (0) target = $region37
    $region36: #{cnn_forward.1} parent=1 // pred_region
      _
    $region37: #{cnn_forward.1} parent=1 // pred_fallthru
      _
    %v34 = vld [vmem:[%s0] sm:$0xff]
    %v35 = vld [vmem:[%s0 + $0x8] sm:$0xff]
    %v36 = vld [vmem:[%s0 + $0x10] sm:$0x3]
    %v37 = vld [vmem:[%s0 + $0x18] sm:$0xff]
    %v38 = vld [vmem:[%s0 + $0x20] sm:$0xff]
    %v39 = vld [vmem:[%s0 + $0x28] sm:$0x3]
    %vm46 = vcmask 1046528
    %v47 = vrot.slane %v34, 1
    %v48 = vrot.slane %v35, 1
    %v49 = vsel %vm46, %v47, %v48
    %v50 = vrot.slane %v36, 1
    %v51 = vsel %vm46, %v48, %v50
    %v52 = vrot.slane %v37, 1
    %v53 = vrot.slane %v38, 1
    %v54 = vsel %vm46, %v52, %v53
    %v55 = vrot.slane %v39, 1
    %v56 = vsel %vm46, %v53, %v55
    %vm57 = vcmask 1045504
    %v58 = vrot.slane %v34, 2
    %v59 = vrot.slane %v35, 2
    %v60 = vsel %vm57, %v58, %v59
    %v61 = vrot.slane %v36, 2
    %v62 = vsel %vm57, %v59, %v61
    %v63 = vrot.slane %v37, 2
    %v64 = vrot.slane %v38, 2
    %v65 = vsel %vm57, %v63, %v64
    %v66 = vrot.slane %v39, 2
    %v67 = vsel %vm57, %v64, %v66
    %68 = vrot.lane.b32.xlu0 %v49, 18
    %v69 = vpop.permute.xlu0 %68
    %70 = vrot.lane.b32.xlu0 %v51, 18
    %v71 = vpop.permute.xlu0 %70
    %72 = vrot.lane.b32.xlu0 %v54, 18
    %v73 = vpop.permute.xlu0 %72
    %74 = vrot.lane.b32.xlu0 %v56, 18
    %v75 = vpop.permute.xlu0 %74
    %80 = vrot.lane.b32.xlu0 %v60, 36
    %v81 = vpop.permute.xlu0 %80
    %82 = vrot.lane.b32.xlu0 %v62, 36
    %v83 = vpop.permute.xlu0 %82
    %84 = vrot.lane.b32.xlu0 %v65, 36
    %v85 = vpop.permute.xlu0 %84
    %86 = vrot.lane.b32.xlu0 %v67, 36
    %v87 = vpop.permute.xlu0 %86
    %vm92 = vcmask 146432
    %v93 = vsel %vm92, %v34, %v69
    %v94 = vsel %vm92, %v35, %v71
    %v95 = vsel %vm92, %v37, %v73
    %v96 = vsel %vm92, %v38, %v75
    %vm97 = vcmask 293888
    %v98 = vsel %vm97, %v93, %v81
    %v99 = vsel %vm97, %v94, %v83
    %v100 = vsel %vm97, %v95, %v85
    %v101 = vsel %vm97, %v96, %v87
    %v102 = vpack.c.bf16 %v99, %v98
    %v103 = vpack.c.bf16 %v101, %v100
    %v104 = vld [vmem:[%s1] sm:$0xff]
    %v105 = vld [vmem:[%s1 + $0x8] sm:$0xff]
    %v106 = vld [vmem:[%s1 + $0x10] sm:$0xff]
    %v107 = vld [vmem:[%s1 + $0x18] sm:$0xff]
    %v108 = vld [vmem:[%s1 + $0x20] sm:$0xff]
    %v109 = vld [vmem:[%s1 + $0x28] sm:$0xff]
    %v110 = vld [vmem:[%s1 + $0x30] sm:$0x77]
    %v118 = vunpack.c.l.b16 %v104
    %v119 = vunpack.c.h.b16 %v104
    %v120 = vunpack.c.l.b16 %v105
    %v121 = vunpack.c.h.b16 %v105
    %v122 = vunpack.c.l.b16 %v106
    %v123 = vunpack.c.h.b16 %v106
    %v124 = vunpack.c.l.b16 %v107
    %v125 = vunpack.c.h.b16 %v107
    %v126 = vunpack.c.l.b16 %v108
    %v127 = vunpack.c.h.b16 %v108
    %v128 = vunpack.c.l.b16 %v109
    %v129 = vunpack.c.h.b16 %v109
    %v130 = vunpack.c.l.b16 %v110
    %v131 = vunpack.c.h.b16 %v110
    %v132 = vpack.c.b16 %v120, %v118
    %v133 = vpack.c.b16 %v121, %v119
    %v134 = vpack.c.b16 %v124, %v122
    %v135 = vpack.c.b16 %v125, %v123
    %v136 = vpack.c.b16 %v128, %v126
    %v137 = vpack.c.b16 %v129, %v127
    %v138 = vpack.c.b16 %v130, %v130
    %v139 = vpack.c.b16 %v131, %v131
    %vm146 = vcmask 441344
    %v148 = vsel %vm146, %v102, 0
    %v151 = vsel %vm146, %v103, 0
    %vm153 = vcmask 1042432
    %v155 = vsel %vm153, %v138, 0
    %v158 = vsel %vm153, %v139, 0
    %160 = vmatprep.subr.bf16.mxu0 %v133
    %161 = vmatpush1.bf16.msra.mxu0 %v132
    %162 = vmatprep.subr.bf16.mxu0 %v135
    %163 = vmatpush1.bf16.msra.mxu0 %v134
    %164 = vmatprep.subr.bf16.mxu0 %v137
    %165 = vmatpush1.bf16.msra.mxu0 %v136
    %166 = vmatprep.subr.bf16.mxu0 %v158
    %167 = vmatpush1.bf16.msra.mxu0 %v155
    %168 = vmatprep.subr.bf16.mxu0 0
    %169 = vmatpush1.bf16.msra.mxu0 0
    %170 = vmatprep.subr.bf16.mxu0 0
    %171 = vmatpush1.bf16.msra.mxu0 0
    %172 = vmatprep.subr.bf16.mxu0 0
    %173 = vmatpush1.bf16.msra.mxu0 0
    %174 = vmatprep.subr.bf16.mxu0 0
    %175 = vmatpush1.bf16.msra.mxu0 0
    %176 = vmatprep.subr.bf16.mxu0 0
    %177 = vmatpush1.bf16.msra.mxu0 0
    %178 = vmatprep.subr.bf16.mxu0 0
    %179 = vmatpush1.bf16.msra.mxu0 0
    %180 = vmatprep.subr.bf16.mxu0 0
    %181 = vmatpush1.bf16.msra.mxu0 0
    %182 = vmatprep.subr.bf16.mxu0 0
    %183 = vmatpush1.bf16.msra.mxu0 0
    %184 = vmatprep.subr.bf16.mxu0 0
    %185 = vmatpush1.bf16.msra.mxu0 0
    %186 = vmatprep.subr.bf16.mxu0 0
    %187 = vmatpush1.bf16.msra.mxu0 0
    %188 = vmatprep.subr.bf16.mxu0 0
    %189 = vmatpush1.bf16.msra.mxu0 0
    %190 = vmatprep.subr.bf16.mxu0 0
    %191 = vmatpush1.bf16.msra.mxu0 0
    %192 = vmatprep.mubr.bf16.mxu0 0
    %193 = vmatmul.mubr.bf16.gmra.mrb[0].mxu0 %v148
    %v194 = vpop.f32.mrb[0].mxu0
    %v195 = vadd.f32 0.0, %v194
    %v196 = vpop.f32.mrb[0].mxu0
    %v197 = vadd.f32 0.0, %v196
    %v198 = vpop.f32.mrb[0].mxu0
    %v199 = vadd.f32 0.0, %v198
    %v200 = vpop.f32.mrb[0].mxu0
    %v201 = vadd.f32 0.0, %v200
    %202 = vmatprep.mubr.bf16.mxu0 0
    %203 = vmatmul.mubr.bf16.gmra.mrb[0].mxu0 %v151
    %v204 = vpop.f32.mrb[0].mxu0
    %v205 = vadd.f32 0.0, %v204
    %v206 = vpop.f32.mrb[0].mxu0
    %v207 = vadd.f32 0.0, %v206
    %v208 = vpop.f32.mrb[0].mxu0
    %v209 = vadd.f32 0.0, %v208
    %v210 = vpop.f32.mrb[0].mxu0
    %v211 = vadd.f32 0.0, %v210
    %212 = vdwg.mxu0
    %v213 = vmax.f32 %v195, %v197
    %v214 = vmax.f32 %v199, %v201
    %v215 = vmax.f32 %v205, %v207
    %v216 = vmax.f32 %v209, %v211
    %v217 = vld [vmem:[%s2] sm:$0x1]
    %v219 = vlaneseq
    %v220 = vshrl.u32 %v219, 7
    %v221 = vsub.s32 0, %v220
    %v222 = vrot.slane %v217, %v221
    %v224 = vadd.f32 %v213, %v222
    %v225 = vadd.f32 %v214, %v222
    %v226 = vadd.f32 %v215, %v222
    %v227 = vadd.f32 %v216, %v222
    %v228 = vmax.f32 %v224, 0.0
    %v229 = vmax.f32 %v225, 0.0
    %v230 = vmax.f32 %v226, 0.0
    %v231 = vmax.f32 %v227, 0.0
    %vm236 = vcmask 1040384
    %v237 = vrot.slane %v228, 7
    %v238 = vrot.slane %v229, 7
    %v239 = vsel %vm236, %v237, %v238
    %v240 = vrot.slane %v230, 7
    %v241 = vrot.slane %v231, 7
    %v242 = vsel %vm236, %v240, %v241
    %v249 = vsel %vm236, 0.0, %v237
    %v250 = vsel %vm236, 0.0, %v240
    %v251 = vsel %vm236, %v238, 0.0
    %v252 = vsel %vm236, %v241, 0.0
    %v257 = vrot.slane %v249, 1
    %v258 = vrot.slane %v239, 1
    %v259 = vsel %vm46, %v257, %v258
    %v260 = vrot.slane %v251, 1
    %v261 = vsel %vm46, %v258, %v260
    %v262 = vrot.slane %v250, 1
    %v263 = vrot.slane %v242, 1
    %v264 = vsel %vm46, %v262, %v263
    %v265 = vrot.slane %v252, 1
    %v266 = vsel %vm46, %v263, %v265
    %v271 = vrot.slane %v249, 2
    %v272 = vrot.slane %v239, 2
    %v273 = vsel %vm57, %v271, %v272
    %v274 = vrot.slane %v251, 2
    %v275 = vsel %vm57, %v272, %v274
    %v276 = vrot.slane %v250, 2
    %v277 = vrot.slane %v242, 2
    %v278 = vsel %vm57, %v276, %v277
    %v279 = vrot.slane %v252, 2
    %v280 = vsel %vm57, %v277, %v279
    %v285 = vpack.c.bf16 %v239, %v249
    %v286 = vpack.c.bf16 %v261, %v259
    %v287 = vpack.c.bf16 %v275, %v273
    %v288 = vpack.c.bf16 %v242, %v250
    %v289 = vpack.c.bf16 %v266, %v264
    %v290 = vpack.c.bf16 %v280, %v278
    %v291 = vld [vmem:[%s3] sm:$0xff]
    %v292 = vld [vmem:[%s3 + $0x8] sm:$0xff]
    %v293 = vld [vmem:[%s3 + $0x10] sm:$0xff]
    %v294 = vld [vmem:[%s3 + $0x18] sm:$0xff]
    %v295 = vld [vmem:[%s3 + $0x20] sm:$0xff]
    %v296 = vld [vmem:[%s3 + $0x28] sm:$0xff]
    %v297 = vld [vmem:[%s3 + $0x30] sm:$0xff]
    %v298 = vld [vmem:[%s3 + $0x38] sm:$0xff]
    %v299 = vld [vmem:[%s3 + $0x40] sm:$0xff]
    %v300 = vld [vmem:[%s3 + $0x48] sm:$0xff]
    %v301 = vld [vmem:[%s3 + $0x50] sm:$0xff]
    %v302 = vld [vmem:[%s3 + $0x58] sm:$0xff]
    %v303 = vld [vmem:[%s3 + $0x60] sm:$0xff]
    %v304 = vld [vmem:[%s3 + $0x68] sm:$0xff]
    %v305 = vld [vmem:[%s3 + $0x70] sm:$0xff]
    %v306 = vld [vmem:[%s3 + $0x78] sm:$0xff]
    %v307 = vld [vmem:[%s3 + $0x80] sm:$0xff]
    %v308 = vld [vmem:[%s3 + $0x88] sm:$0xff]
    %v309 = vld [vmem:[%s3 + $0x90] sm:$0xff]
    %v310 = vld [vmem:[%s3 + $0x98] sm:$0xff]
    %v311 = vld [vmem:[%s3 + $0xa0] sm:$0xff]
    %v312 = vld [vmem:[%s3 + $0xa8] sm:$0xff]
    %v313 = vld [vmem:[%s3 + $0xb0] sm:$0xff]
    %v314 = vld [vmem:[%s3 + $0xb8] sm:$0xff]
    %v315 = vld [vmem:[%s3 + $0xc0] sm:$0xff]
    %v316 = vld [vmem:[%s3 + $0xc8] sm:$0xff]
    %v317 = vld [vmem:[%s3 + $0xd0] sm:$0xff]
    %v318 = vld [vmem:[%s3 + $0xd8] sm:$0xff]
    %v319 = vld [vmem:[%s3 + $0xe0] sm:$0xff]
    %v320 = vld [vmem:[%s3 + $0xe8] sm:$0xff]
    %v321 = vld [vmem:[%s3 + $0xf0] sm:$0xff]
    %v322 = vld [vmem:[%s3 + $0xf8] sm:$0xff]
    %v323 = vld [vmem:[%s3 + $0x100] sm:$0xff]
    %v324 = vld [vmem:[%s3 + $0x108] sm:$0xff]
    %v325 = vld [vmem:[%s3 + $0x110] sm:$0xff]
    %v326 = vld [vmem:[%s3 + $0x118] sm:$0xff]
    %v327 = vld [vmem:[%s3 + $0x120] sm:$0xff]
    %v328 = vld [vmem:[%s3 + $0x128] sm:$0xff]
    %v329 = vld [vmem:[%s3 + $0x130] sm:$0xff]
    %v330 = vld [vmem:[%s3 + $0x138] sm:$0xff]
    %v331 = vld [vmem:[%s3 + $0x140] sm:$0xff]
    %v332 = vld [vmem:[%s3 + $0x148] sm:$0xff]
    %v333 = vld [vmem:[%s3 + $0x150] sm:$0xff]
    %v334 = vld [vmem:[%s3 + $0x158] sm:$0xff]
    %v335 = vld [vmem:[%s3 + $0x160] sm:$0xff]
    %v336 = vld [vmem:[%s3 + $0x168] sm:$0xff]
    %v337 = vld [vmem:[%s3 + $0x170] sm:$0xff]
    %v338 = vld [vmem:[%s3 + $0x178] sm:$0xff]
    %v339 = vld [vmem:[%s4] sm:$0x3]
    %v341 = vlaneseq
    %v342 = vshrl.u32 %v341, 7
    %v343 = vsub.s32 0, %v342
    %v344 = vrot.slane %v339, %v343
    %v345 = vlaneseq
    %v346 = vshrl.u32 %v345, 7
    %v347 = vsub.s32 1, %v346
    %v348 = vrot.slane %v339, %v347
    %v399 = vunpack.c.l.b16 %v291
    %v400 = vunpack.c.h.b16 %v291
    %v401 = vunpack.c.l.b16 %v292
    %v402 = vunpack.c.h.b16 %v292
    %v403 = vunpack.c.l.b16 %v293
    %v404 = vunpack.c.h.b16 %v293
    %v405 = vunpack.c.l.b16 %v294
    %v406 = vunpack.c.h.b16 %v294
    %v407 = vunpack.c.l.b16 %v295
    %v408 = vunpack.c.h.b16 %v295
    %v409 = vunpack.c.l.b16 %v296
    %v410 = vunpack.c.h.b16 %v296
    %v411 = vunpack.c.l.b16 %v297
    %v412 = vunpack.c.h.b16 %v297
    %v413 = vunpack.c.l.b16 %v298
    %v414 = vunpack.c.h.b16 %v298
    %v415 = vunpack.c.l.b16 %v299
    %v416 = vunpack.c.h.b16 %v299
    %v417 = vunpack.c.l.b16 %v300
    %v418 = vunpack.c.h.b16 %v300
    %v419 = vunpack.c.l.b16 %v301
    %v420 = vunpack.c.h.b16 %v301
    %v421 = vunpack.c.l.b16 %v302
    %v422 = vunpack.c.h.b16 %v302
    %v423 = vunpack.c.l.b16 %v303
    %v424 = vunpack.c.h.b16 %v303
    %v425 = vunpack.c.l.b16 %v304
    %v426 = vunpack.c.h.b16 %v304
    %v427 = vunpack.c.l.b16 %v305
    %v428 = vunpack.c.h.b16 %v305
    %v429 = vunpack.c.l.b16 %v306
    %v430 = vunpack.c.h.b16 %v306
    %v431 = vunpack.c.l.b16 %v307
    %v432 = vunpack.c.h.b16 %v307
    %v433 = vunpack.c.l.b16 %v308
    %v434 = vunpack.c.h.b16 %v308
    %v435 = vunpack.c.l.b16 %v309
    %v436 = vunpack.c.h.b16 %v309
    %v437 = vunpack.c.l.b16 %v310
    %v438 = vunpack.c.h.b16 %v310
    %v439 = vunpack.c.l.b16 %v311
    %v440 = vunpack.c.h.b16 %v311
    %v441 = vunpack.c.l.b16 %v312
    %v442 = vunpack.c.h.b16 %v312
    %v443 = vunpack.c.l.b16 %v313
    %v444 = vunpack.c.h.b16 %v313
    %v445 = vunpack.c.l.b16 %v314
    %v446 = vunpack.c.h.b16 %v314
    %v447 = vunpack.c.l.b16 %v315
    %v448 = vunpack.c.h.b16 %v315
    %v449 = vunpack.c.l.b16 %v316
    %v450 = vunpack.c.h.b16 %v316
    %v451 = vunpack.c.l.b16 %v317
    %v452 = vunpack.c.h.b16 %v317
    %v453 = vunpack.c.l.b16 %v318
    %v454 = vunpack.c.h.b16 %v318
    %v455 = vunpack.c.l.b16 %v319
    %v456 = vunpack.c.h.b16 %v319
    %v457 = vunpack.c.l.b16 %v320
    %v458 = vunpack.c.h.b16 %v320
    %v459 = vunpack.c.l.b16 %v321
    %v460 = vunpack.c.h.b16 %v321
    %v461 = vunpack.c.l.b16 %v322
    %v462 = vunpack.c.h.b16 %v322
    %v463 = vunpack.c.l.b16 %v323
    %v464 = vunpack.c.h.b16 %v323
    %v465 = vunpack.c.l.b16 %v324
    %v466 = vunpack.c.h.b16 %v324
    %v467 = vunpack.c.l.b16 %v325
    %v468 = vunpack.c.h.b16 %v325
    %v469 = vunpack.c.l.b16 %v326
    %v470 = vunpack.c.h.b16 %v326
    %v471 = vunpack.c.l.b16 %v327
    %v472 = vunpack.c.h.b16 %v327
    %v473 = vunpack.c.l.b16 %v328
    %v474 = vunpack.c.h.b16 %v328
    %v475 = vunpack.c.l.b16 %v329
    %v476 = vunpack.c.h.b16 %v329
    %v477 = vunpack.c.l.b16 %v330
    %v478 = vunpack.c.h.b16 %v330
    %v479 = vunpack.c.l.b16 %v331
    %v480 = vunpack.c.h.b16 %v331
    %v481 = vunpack.c.l.b16 %v332
    %v482 = vunpack.c.h.b16 %v332
    %v483 = vunpack.c.l.b16 %v333
    %v484 = vunpack.c.h.b16 %v333
    %v485 = vunpack.c.l.b16 %v334
    %v486 = vunpack.c.h.b16 %v334
    %v487 = vunpack.c.l.b16 %v335
    %v488 = vunpack.c.h.b16 %v335
    %v489 = vunpack.c.l.b16 %v336
    %v490 = vunpack.c.h.b16 %v336
    %v491 = vunpack.c.l.b16 %v337
    %v492 = vunpack.c.h.b16 %v337
    %v493 = vunpack.c.l.b16 %v338
    %v494 = vunpack.c.h.b16 %v338
    %v495 = vpack.c.b16 %v401, %v399
    %v496 = vpack.c.b16 %v402, %v400
    %v497 = vpack.c.b16 %v405, %v403
    %v498 = vpack.c.b16 %v406, %v404
    %v499 = vpack.c.b16 %v409, %v407
    %v500 = vpack.c.b16 %v410, %v408
    %v501 = vpack.c.b16 %v413, %v411
    %v502 = vpack.c.b16 %v414, %v412
    %v503 = vpack.c.b16 %v417, %v415
    %v504 = vpack.c.b16 %v418, %v416
    %v505 = vpack.c.b16 %v421, %v419
    %v506 = vpack.c.b16 %v422, %v420
    %v507 = vpack.c.b16 %v425, %v423
    %v508 = vpack.c.b16 %v426, %v424
    %v509 = vpack.c.b16 %v429, %v427
    %v510 = vpack.c.b16 %v430, %v428
    %v511 = vpack.c.b16 %v433, %v431
    %v512 = vpack.c.b16 %v434, %v432
    %v513 = vpack.c.b16 %v437, %v435
    %v514 = vpack.c.b16 %v438, %v436
    %v515 = vpack.c.b16 %v441, %v439
    %v516 = vpack.c.b16 %v442, %v440
    %v517 = vpack.c.b16 %v445, %v443
    %v518 = vpack.c.b16 %v446, %v444
    %v519 = vpack.c.b16 %v449, %v447
    %v520 = vpack.c.b16 %v450, %v448
    %v521 = vpack.c.b16 %v453, %v451
    %v522 = vpack.c.b16 %v454, %v452
    %v523 = vpack.c.b16 %v457, %v455
    %v524 = vpack.c.b16 %v458, %v456
    %v525 = vpack.c.b16 %v461, %v459
    %v526 = vpack.c.b16 %v462, %v460
    %v527 = vpack.c.b16 %v465, %v463
    %v528 = vpack.c.b16 %v466, %v464
    %v529 = vpack.c.b16 %v469, %v467
    %v530 = vpack.c.b16 %v470, %v468
    %v531 = vpack.c.b16 %v473, %v471
    %v532 = vpack.c.b16 %v474, %v472
    %v533 = vpack.c.b16 %v477, %v475
    %v534 = vpack.c.b16 %v478, %v476
    %v535 = vpack.c.b16 %v481, %v479
    %v536 = vpack.c.b16 %v482, %v480
    %v537 = vpack.c.b16 %v485, %v483
    %v538 = vpack.c.b16 %v486, %v484
    %v539 = vpack.c.b16 %v489, %v487
    %v540 = vpack.c.b16 %v490, %v488
    %v541 = vpack.c.b16 %v493, %v491
    %v542 = vpack.c.b16 %v494, %v492
    %591 = vmatprep.subr.bf16.mxu0 %v496
    %592 = vmatpush1.bf16.msra.mxu0 %v495
    %593 = vmatprep.subr.bf16.mxu0 %v498
    %594 = vmatpush1.bf16.msra.mxu0 %v497
    %595 = vmatprep.subr.bf16.mxu0 %v500
    %596 = vmatpush1.bf16.msra.mxu0 %v499
    %597 = vmatprep.subr.bf16.mxu0 %v502
    %598 = vmatpush1.bf16.msra.mxu0 %v501
    %599 = vmatprep.subr.bf16.mxu0 %v504
    %600 = vmatpush1.bf16.msra.mxu0 %v503
    %601 = vmatprep.subr.bf16.mxu0 %v506
    %602 = vmatpush1.bf16.msra.mxu0 %v505
    %603 = vmatprep.subr.bf16.mxu0 %v508
    %604 = vmatpush1.bf16.msra.mxu0 %v507
    %605 = vmatprep.subr.bf16.mxu0 %v510
    %606 = vmatpush1.bf16.msra.mxu0 %v509
    %607 = vmatprep.subr.bf16.mxu0 %v512
    %608 = vmatpush1.bf16.msra.mxu0 %v511
    %609 = vmatprep.subr.bf16.mxu0 %v514
    %610 = vmatpush1.bf16.msra.mxu0 %v513
    %611 = vmatprep.subr.bf16.mxu0 %v516
    %612 = vmatpush1.bf16.msra.mxu0 %v515
    %613 = vmatprep.subr.bf16.mxu0 %v518
    %614 = vmatpush1.bf16.msra.mxu0 %v517
    %615 = vmatprep.subr.bf16.mxu0 %v520
    %616 = vmatpush1.bf16.msra.mxu0 %v519
    %617 = vmatprep.subr.bf16.mxu0 %v522
    %618 = vmatpush1.bf16.msra.mxu0 %v521
    %619 = vmatprep.subr.bf16.mxu0 %v524
    %620 = vmatpush1.bf16.msra.mxu0 %v523
    %621 = vmatprep.subr.bf16.mxu0 %v526
    %622 = vmatpush1.bf16.msra.mxu0 %v525
    %623 = vmatprep.mubr.bf16.mxu0 %v286
    %624 = vmatmul.mubr.bf16.gmra.mrb[0].mxu0 %v285
    %v625 = vpop.f32.mrb[0].mxu0
    %v626 = vadd.f32 %v344, %v625
    %v627 = vpop.f32.mrb[0].mxu0
    %v628 = vadd.f32 %v348, %v627
    %v629 = vpop.f32.mrb[0].mxu0
    %v630 = vadd.f32 %v344, %v629
    %v631 = vpop.f32.mrb[0].mxu0
    %v632 = vadd.f32 %v348, %v631
    %633 = vmatprep.mubr.bf16.mxu0 %v289
    %634 = vmatmul.mubr.bf16.gmra.mrb[0].mxu0 %v288
    %v635 = vpop.f32.mrb[0].mxu0
    %v636 = vadd.f32 %v344, %v635
    %v637 = vpop.f32.mrb[0].mxu0
    %v638 = vadd.f32 %v348, %v637
    %v639 = vpop.f32.mrb[0].mxu0
    %v640 = vadd.f32 %v344, %v639
    %v641 = vpop.f32.mrb[0].mxu0
    %v642 = vadd.f32 %v348, %v641
    %643 = vdwg.mxu0
    %644 = vmatprep.subr.bf16.mxu0 %v528
    %645 = vmatpush1.bf16.msra.mxu0 %v527
    %646 = vmatprep.subr.bf16.mxu0 %v530
    %647 = vmatpush1.bf16.msra.mxu0 %v529
    %648 = vmatprep.subr.bf16.mxu0 %v532
    %649 = vmatpush1.bf16.msra.mxu0 %v531
    %650 = vmatprep.subr.bf16.mxu0 %v534
    %651 = vmatpush1.bf16.msra.mxu0 %v533
    %652 = vmatprep.subr.bf16.mxu0 %v536
    %653 = vmatpush1.bf16.msra.mxu0 %v535
    %654 = vmatprep.subr.bf16.mxu0 %v538
    %655 = vmatpush1.bf16.msra.mxu0 %v537
    %656 = vmatprep.subr.bf16.mxu0 %v540
    %657 = vmatpush1.bf16.msra.mxu0 %v539
    %658 = vmatprep.subr.bf16.mxu0 %v542
    %659 = vmatpush1.bf16.msra.mxu0 %v541
    %660 = vmatprep.subr.bf16.mxu0 0
    %661 = vmatpush1.bf16.msra.mxu0 0
    %662 = vmatprep.subr.bf16.mxu0 0
    %663 = vmatpush1.bf16.msra.mxu0 0
    %664 = vmatprep.subr.bf16.mxu0 0
    %665 = vmatpush1.bf16.msra.mxu0 0
    %666 = vmatprep.subr.bf16.mxu0 0
    %667 = vmatpush1.bf16.msra.mxu0 0
    %668 = vmatprep.subr.bf16.mxu0 0
    %669 = vmatpush1.bf16.msra.mxu0 0
    %670 = vmatprep.subr.bf16.mxu0 0
    %671 = vmatpush1.bf16.msra.mxu0 0
    %672 = vmatprep.subr.bf16.mxu0 0
    %673 = vmatpush1.bf16.msra.mxu0 0
    %674 = vmatprep.subr.bf16.mxu0 0
    %675 = vmatpush1.bf16.msra.mxu0 0
    %676 = vmatprep.mubr.bf16.mxu0 0
    %677 = vmatmul.mubr.bf16.gmra.mrb[0].mxu0 %v287
    %v678 = vpop.f32.mrb[0].mxu0
    %v679 = vadd.f32 %v626, %v678
    %v680 = vpop.f32.mrb[0].mxu0
    %v681 = vadd.f32 %v628, %v680
    %v682 = vpop.f32.mrb[0].mxu0
    %v683 = vadd.f32 %v630, %v682
    %v684 = vpop.f32.mrb[0].mxu0
    %v685 = vadd.f32 %v632, %v684
    %686 = vmatprep.mubr.bf16.mxu0 0
    %687 = vmatmul.mubr.bf16.gmra.mrb[0].mxu0 %v290
    %v688 = vpop.f32.mrb[0].mxu0
    %v689 = vadd.f32 %v636, %v688
    %v690 = vpop.f32.mrb[0].mxu0
    %v691 = vadd.f32 %v638, %v690
    %v692 = vpop.f32.mrb[0].mxu0
    %v693 = vadd.f32 %v640, %v692
    %v694 = vpop.f32.mrb[0].mxu0
    %v695 = vadd.f32 %v642, %v694
    %696 = vdwg.mxu0
    %v697 = vmax.f32 %v679, 0.0
    %v698 = vmax.f32 %v681, 0.0
    %v699 = vmax.f32 %v683, 0.0
    %v700 = vmax.f32 %v685, 0.0
    %v701 = vmax.f32 %v689, 0.0
    %v702 = vmax.f32 %v691, 0.0
    %v703 = vmax.f32 %v693, 0.0
    %v704 = vmax.f32 %v695, 0.0
    %v705 = vrot.slane %v697, 4
    %v706 = vadd.f32 %v697, %v705
    %v707 = vrot.slane %v706, 2
    %v708 = vadd.f32 %v706, %v707
    %v709 = vrot.slane %v708, 1
    %v710 = vadd.f32 %v708, %v709
    %v711 = vrot.slane %v698, 4
    %v712 = vadd.f32 %v698, %v711
    %v713 = vrot.slane %v712, 2
    %v714 = vadd.f32 %v712, %v713
    %v715 = vrot.slane %v714, 1
    %v716 = vadd.f32 %v714, %v715
    %v717 = vrot.slane %v701, 4
    %v718 = vadd.f32 %v701, %v717
    %v719 = vrot.slane %v718, 2
    %v720 = vadd.f32 %v718, %v719
    %v721 = vrot.slane %v720, 1
    %v722 = vadd.f32 %v720, %v721
    %v723 = vrot.slane %v702, 4
    %v724 = vadd.f32 %v702, %v723
    %v725 = vrot.slane %v724, 2
    %v726 = vadd.f32 %v724, %v725
    %v727 = vrot.slane %v726, 1
    %v728 = vadd.f32 %v726, %v727
    %v729 = vrot.slane %v699, 4
    %v730 = vadd.f32 %v699, %v729
    %v731 = vrot.slane %v730, 2
    %v732 = vadd.f32 %v730, %v731
    %v733 = vrot.slane %v732, 1
    %v734 = vadd.f32 %v732, %v733
    %v735 = vrot.slane %v700, 4
    %v736 = vadd.f32 %v700, %v735
    %v737 = vrot.slane %v736, 2
    %v738 = vadd.f32 %v736, %v737
    %v739 = vrot.slane %v738, 1
    %v740 = vadd.f32 %v738, %v739
    %v741 = vrot.slane %v703, 4
    %v742 = vadd.f32 %v703, %v741
    %v743 = vrot.slane %v742, 2
    %v744 = vadd.f32 %v742, %v743
    %v745 = vrot.slane %v744, 1
    %v746 = vadd.f32 %v744, %v745
    %v747 = vrot.slane %v704, 4
    %v748 = vadd.f32 %v704, %v747
    %v749 = vrot.slane %v748, 2
    %v750 = vadd.f32 %v748, %v749
    %v751 = vrot.slane %v750, 1
    %v752 = vadd.f32 %v750, %v751
    %vm757 = vcmask 1041409
    %v758 = vsel %vm757, %v722, %v710
    %v759 = vsel %vm757, %v728, %v716
    %v766 = vsel %vm757, %v746, %v734
    %v767 = vsel %vm757, %v752, %v740
    %v770 = vpack.c.bf16 %v758, %v758
    %v771 = vpack.c.bf16 %v759, %v759
    %v772 = vpack.c.bf16 %v766, %v766
    %v773 = vpack.c.bf16 %v767, %v767
    %v774 = vld [vmem:[%s5] sm:$0xf]
    %v775 = vld [vmem:[%s5 + $0x4] sm:$0xf]
    %v776 = vld [vmem:[%s5 + $0x8] sm:$0xf]
    %v777 = vld [vmem:[%s5 + $0xc] sm:$0xf]
    %v778 = vld [vmem:[%s5 + $0x10] sm:$0xf]
    %v779 = vld [vmem:[%s5 + $0x14] sm:$0xf]
    %v780 = vld [vmem:[%s5 + $0x18] sm:$0xf]
    %v781 = vld [vmem:[%s5 + $0x1c] sm:$0xf]
    %v782 = vld [vmem:[%s5 + $0x20] sm:$0xf]
    %v783 = vld [vmem:[%s5 + $0x24] sm:$0xf]
    %v784 = vld [vmem:[%s5 + $0x28] sm:$0xf]
    %v785 = vld [vmem:[%s5 + $0x2c] sm:$0xf]
    %v786 = vld [vmem:[%s5 + $0x30] sm:$0xf]
    %v787 = vld [vmem:[%s5 + $0x34] sm:$0xf]
    %v788 = vld [vmem:[%s5 + $0x38] sm:$0xf]
    %v789 = vld [vmem:[%s5 + $0x3c] sm:$0xf]
    %v790 = vld [vmem:[%s5 + $0x40] sm:$0xf]
    %v791 = vld [vmem:[%s5 + $0x44] sm:$0xf]
    %v792 = vld [vmem:[%s5 + $0x48] sm:$0xf]
    %v793 = vld [vmem:[%s5 + $0x4c] sm:$0xf]
    %v794 = vld [vmem:[%s5 + $0x50] sm:$0xf]
    %v795 = vld [vmem:[%s5 + $0x54] sm:$0xf]
    %v796 = vld [vmem:[%s5 + $0x58] sm:$0xf]
    %v797 = vld [vmem:[%s5 + $0x5c] sm:$0xf]
    %v798 = vld [vmem:[%s5 + $0x60] sm:$0xf]
    %v799 = vld [vmem:[%s5 + $0x64] sm:$0xf]
    %v800 = vld [vmem:[%s5 + $0x68] sm:$0xf]
    %v801 = vld [vmem:[%s5 + $0x6c] sm:$0xf]
    %v802 = vld [vmem:[%s5 + $0x70] sm:$0xf]
    %v803 = vld [vmem:[%s5 + $0x74] sm:$0xf]
    %v804 = vld [vmem:[%s5 + $0x78] sm:$0xf]
    %v805 = vld [vmem:[%s5 + $0x7c] sm:$0xf]
    %v806 = vld [vmem:[%s5 + $0x80] sm:$0xf]
    %v807 = vld [vmem:[%s5 + $0x84] sm:$0xf]
    %v808 = vld [vmem:[%s5 + $0x88] sm:$0xf]
    %v809 = vld [vmem:[%s5 + $0x8c] sm:$0xf]
    %v810 = vld [vmem:[%s5 + $0x90] sm:$0xf]
    %v811 = vld [vmem:[%s5 + $0x94] sm:$0xf]
    %v812 = vld [vmem:[%s5 + $0x98] sm:$0xf]
    %v813 = vld [vmem:[%s5 + $0x9c] sm:$0xf]
    %v814 = vld [vmem:[%s5 + $0xa0] sm:$0xf]
    %v815 = vld [vmem:[%s5 + $0xa4] sm:$0xf]
    %v816 = vld [vmem:[%s5 + $0xa8] sm:$0xf]
    %v817 = vld [vmem:[%s5 + $0xac] sm:$0xf]
    %v818 = vld [vmem:[%s5 + $0xb0] sm:$0xf]
    %v819 = vld [vmem:[%s5 + $0xb4] sm:$0xf]
    %v820 = vld [vmem:[%s5 + $0xb8] sm:$0xf]
    %v821 = vld [vmem:[%s5 + $0xbc] sm:$0xf]
    %v822 = vld [vmem:[%s5 + $0xc0] sm:$0xf]
    %v823 = vld [vmem:[%s5 + $0xc4] sm:$0xf]
    %v824 = vld [vmem:[%s5 + $0xc8] sm:$0xf]
    %v825 = vld [vmem:[%s5 + $0xcc] sm:$0xf]
    %v826 = vld [vmem:[%s5 + $0xd0] sm:$0xf]
    %v827 = vld [vmem:[%s5 + $0xd4] sm:$0xf]
    %v828 = vld [vmem:[%s5 + $0xd8] sm:$0xf]
    %v829 = vld [vmem:[%s5 + $0xdc] sm:$0xf]
    %v830 = vld [vmem:[%s5 + $0xe0] sm:$0xf]
    %v831 = vld [vmem:[%s5 + $0xe4] sm:$0xf]
    %v832 = vld [vmem:[%s5 + $0xe8] sm:$0xf]
    %v833 = vld [vmem:[%s5 + $0xec] sm:$0xf]
    %v834 = vld [vmem:[%s5 + $0xf0] sm:$0xf]
    %v835 = vld [vmem:[%s5 + $0xf4] sm:$0xf]
    %v836 = vld [vmem:[%s5 + $0xf8] sm:$0xf]
    %v837 = vld [vmem:[%s5 + $0xfc] sm:$0xf]
    %v838 = vld [vmem:[%s6] sm:$0x1]
    %v840 = vlaneseq
    %v841 = vshrl.u32 %v840, 7
    %v842 = vsub.s32 0, %v841
    %v843 = vrot.slane %v838, %v842
    %v909 = vunpack.c.l.b16 %v774
    %v910 = vunpack.c.l.b16 %v775
    %v911 = vunpack.c.l.b16 %v776
    %v912 = vunpack.c.l.b16 %v777
    %v913 = vunpack.c.l.b16 %v778
    %v914 = vunpack.c.l.b16 %v779
    %v915 = vunpack.c.l.b16 %v780
    %v916 = vunpack.c.l.b16 %v781
    %v917 = vunpack.c.l.b16 %v782
    %v918 = vunpack.c.l.b16 %v783
    %v919 = vunpack.c.l.b16 %v784
    %v920 = vunpack.c.l.b16 %v785
    %v921 = vunpack.c.l.b16 %v786
    %v922 = vunpack.c.l.b16 %v787
    %v923 = vunpack.c.l.b16 %v788
    %v924 = vunpack.c.l.b16 %v789
    %v925 = vunpack.c.l.b16 %v790
    %v926 = vunpack.c.l.b16 %v791
    %v927 = vunpack.c.l.b16 %v792
    %v928 = vunpack.c.l.b16 %v793
    %v929 = vunpack.c.l.b16 %v794
    %v930 = vunpack.c.l.b16 %v795
    %v931 = vunpack.c.l.b16 %v796
    %v932 = vunpack.c.l.b16 %v797
    %v933 = vunpack.c.l.b16 %v798
    %v934 = vunpack.c.l.b16 %v799
    %v935 = vunpack.c.l.b16 %v800
    %v936 = vunpack.c.l.b16 %v801
    %v937 = vunpack.c.l.b16 %v802
    %v938 = vunpack.c.l.b16 %v803
    %v939 = vunpack.c.l.b16 %v804
    %v940 = vunpack.c.l.b16 %v805
    %v941 = vunpack.c.l.b16 %v806
    %v942 = vunpack.c.l.b16 %v807
    %v943 = vunpack.c.l.b16 %v808
    %v944 = vunpack.c.l.b16 %v809
    %v945 = vunpack.c.l.b16 %v810
    %v946 = vunpack.c.l.b16 %v811
    %v947 = vunpack.c.l.b16 %v812
    %v948 = vunpack.c.l.b16 %v813
    %v949 = vunpack.c.l.b16 %v814
    %v950 = vunpack.c.l.b16 %v815
    %v951 = vunpack.c.l.b16 %v816
    %v952 = vunpack.c.l.b16 %v817
    %v953 = vunpack.c.l.b16 %v818
    %v954 = vunpack.c.l.b16 %v819
    %v955 = vunpack.c.l.b16 %v820
    %v956 = vunpack.c.l.b16 %v821
    %v957 = vunpack.c.l.b16 %v822
    %v958 = vunpack.c.l.b16 %v823
    %v959 = vunpack.c.l.b16 %v824
    %v960 = vunpack.c.l.b16 %v825
    %v961 = vunpack.c.l.b16 %v826
    %v962 = vunpack.c.l.b16 %v827
    %v963 = vunpack.c.l.b16 %v828
    %v964 = vunpack.c.l.b16 %v829
    %v965 = vunpack.c.l.b16 %v830
    %v966 = vunpack.c.l.b16 %v831
    %v967 = vunpack.c.l.b16 %v832
    %v968 = vunpack.c.l.b16 %v833
    %v969 = vunpack.c.l.b16 %v834
    %v970 = vunpack.c.l.b16 %v835
    %v971 = vunpack.c.l.b16 %v836
    %v972 = vunpack.c.l.b16 %v837
    %v973 = vpack.c.b16 %v910, %v909
    %v974 = vpack.c.b16 %v912, %v911
    %v975 = vpack.c.b16 %v914, %v913
    %v976 = vpack.c.b16 %v916, %v915
    %v977 = vpack.c.b16 %v918, %v917
    %v978 = vpack.c.b16 %v920, %v919
    %v979 = vpack.c.b16 %v922, %v921
    %v980 = vpack.c.b16 %v924, %v923
    %v981 = vpack.c.b16 %v926, %v925
    %v982 = vpack.c.b16 %v928, %v927
    %v983 = vpack.c.b16 %v930, %v929
    %v984 = vpack.c.b16 %v932, %v931
    %v985 = vpack.c.b16 %v934, %v933
    %v986 = vpack.c.b16 %v936, %v935
    %v987 = vpack.c.b16 %v938, %v937
    %v988 = vpack.c.b16 %v940, %v939
    %v989 = vpack.c.b16 %v942, %v941
    %v990 = vpack.c.b16 %v944, %v943
    %v991 = vpack.c.b16 %v946, %v945
    %v992 = vpack.c.b16 %v948, %v947
    %v993 = vpack.c.b16 %v950, %v949
    %v994 = vpack.c.b16 %v952, %v951
    %v995 = vpack.c.b16 %v954, %v953
    %v996 = vpack.c.b16 %v956, %v955
    %v997 = vpack.c.b16 %v958, %v957
    %v998 = vpack.c.b16 %v960, %v959
    %v999 = vpack.c.b16 %v962, %v961
    %v1000 = vpack.c.b16 %v964, %v963
    %v1001 = vpack.c.b16 %v966, %v965
    %v1002 = vpack.c.b16 %v968, %v967
    %v1003 = vpack.c.b16 %v970, %v969
    %v1004 = vpack.c.b16 %v972, %v971
    %1037 = vmatprep.subr.bf16.mxu0 0
    %1038 = vmatpush1.bf16.msra.mxu0 %v973
    %1039 = vmatprep.subr.bf16.mxu0 0
    %1040 = vmatpush1.bf16.msra.mxu0 %v974
    %1041 = vmatprep.subr.bf16.mxu0 0
    %1042 = vmatpush1.bf16.msra.mxu0 %v975
    %1043 = vmatprep.subr.bf16.mxu0 0
    %1044 = vmatpush1.bf16.msra.mxu0 %v976
    %1045 = vmatprep.subr.bf16.mxu0 0
    %1046 = vmatpush1.bf16.msra.mxu0 %v977
    %1047 = vmatprep.subr.bf16.mxu0 0
    %1048 = vmatpush1.bf16.msra.mxu0 %v978
    %1049 = vmatprep.subr.bf16.mxu0 0
    %1050 = vmatpush1.bf16.msra.mxu0 %v979
    %1051 = vmatprep.subr.bf16.mxu0 0
    %1052 = vmatpush1.bf16.msra.mxu0 %v980
    %1053 = vmatprep.subr.bf16.mxu0 0
    %1054 = vmatpush1.bf16.msra.mxu0 %v981
    %1055 = vmatprep.subr.bf16.mxu0 0
    %1056 = vmatpush1.bf16.msra.mxu0 %v982
    %1057 = vmatprep.subr.bf16.mxu0 0
    %1058 = vmatpush1.bf16.msra.mxu0 %v983
    %1059 = vmatprep.subr.bf16.mxu0 0
    %1060 = vmatpush1.bf16.msra.mxu0 %v984
    %1061 = vmatprep.subr.bf16.mxu0 0
    %1062 = vmatpush1.bf16.msra.mxu0 %v985
    %1063 = vmatprep.subr.bf16.mxu0 0
    %1064 = vmatpush1.bf16.msra.mxu0 %v986
    %1065 = vmatprep.subr.bf16.mxu0 0
    %1066 = vmatpush1.bf16.msra.mxu0 %v987
    %1067 = vmatprep.subr.bf16.mxu0 0
    %1068 = vmatpush1.bf16.msra.mxu0 %v988
    %1069 = vmatprep.mubr.bf16.mxu0 %v771
    %1070 = vmatmul.mubr.bf16.gmra.mrb[0].mxu0 %v770
    %v1071 = vpop.f32.mrb[0].mxu0
    %v1072 = vadd.f32 %v843, %v1071
    %v1073 = vpop.f32.mrb[0].mxu0
    %v1074 = vpop.f32.mrb[0].mxu0
    %v1075 = vpop.f32.mrb[0].mxu0
    %1076 = vdwg.mxu0
    %1077 = vmatprep.subr.bf16.mxu0 0
    %1078 = vmatpush1.bf16.msra.mxu0 %v989
    %1079 = vmatprep.subr.bf16.mxu0 0
    %1080 = vmatpush1.bf16.msra.mxu0 %v990
    %1081 = vmatprep.subr.bf16.mxu0 0
    %1082 = vmatpush1.bf16.msra.mxu0 %v991
    %1083 = vmatprep.subr.bf16.mxu0 0
    %1084 = vmatpush1.bf16.msra.mxu0 %v992
    %1085 = vmatprep.subr.bf16.mxu0 0
    %1086 = vmatpush1.bf16.msra.mxu0 %v993
    %1087 = vmatprep.subr.bf16.mxu0 0
    %1088 = vmatpush1.bf16.msra.mxu0 %v994
    %1089 = vmatprep.subr.bf16.mxu0 0
    %1090 = vmatpush1.bf16.msra.mxu0 %v995
    %1091 = vmatprep.subr.bf16.mxu0 0
    %1092 = vmatpush1.bf16.msra.mxu0 %v996
    %1093 = vmatprep.subr.bf16.mxu0 0
    %1094 = vmatpush1.bf16.msra.mxu0 %v997
    %1095 = vmatprep.subr.bf16.mxu0 0
    %1096 = vmatpush1.bf16.msra.mxu0 %v998
    %1097 = vmatprep.subr.bf16.mxu0 0
    %1098 = vmatpush1.bf16.msra.mxu0 %v999
    %1099 = vmatprep.subr.bf16.mxu0 0
    %1100 = vmatpush1.bf16.msra.mxu0 %v1000
    %1101 = vmatprep.subr.bf16.mxu0 0
    %1102 = vmatpush1.bf16.msra.mxu0 %v1001
    %1103 = vmatprep.subr.bf16.mxu0 0
    %1104 = vmatpush1.bf16.msra.mxu0 %v1002
    %1105 = vmatprep.subr.bf16.mxu0 0
    %1106 = vmatpush1.bf16.msra.mxu0 %v1003
    %1107 = vmatprep.subr.bf16.mxu0 0
    %1108 = vmatpush1.bf16.msra.mxu0 %v1004
    %1109 = vmatprep.mubr.bf16.mxu0 %v773
    %1110 = vmatmul.mubr.bf16.gmra.mrb[0].mxu0 %v772
    %v1111 = vpop.f32.mrb[0].mxu0
    %v1112 = vadd.f32 %v1072, %v1111
    %v1113 = vpop.f32.mrb[0].mxu0
    %v1114 = vpop.f32.mrb[0].mxu0
    %v1115 = vpop.f32.mrb[0].mxu0
    %1116 = vdwg.mxu0
    %v1117 = vmax.f32 %v1112, 0.0
    %v1118 = vpack.c.bf16 %v1117, %v1117
    %v1119 = vld [vmem:[%s7] sm:$0xf]
    %v1120 = vld [vmem:[%s7 + $0x4] sm:$0xf]
    %v1121 = vld [vmem:[%s7 + $0x8] sm:$0xf]
    %v1122 = vld [vmem:[%s7 + $0xc] sm:$0xf]
    %v1123 = vld [vmem:[%s7 + $0x10] sm:$0xf]
    %v1124 = vld [vmem:[%s7 + $0x14] sm:$0xf]
    %v1125 = vld [vmem:[%s7 + $0x18] sm:$0xf]
    %v1126 = vld [vmem:[%s7 + $0x1c] sm:$0xf]
    %v1127 = vld [vmem:[%s8] sm:$0x1]
    %v1129 = vlaneseq
    %v1130 = vshrl.u32 %v1129, 7
    %v1131 = vsub.s32 0, %v1130
    %v1132 = vrot.slane %v1127, %v1131
    %v1142 = vunpack.c.l.b16 %v1119
    %v1143 = vunpack.c.l.b16 %v1120
    %v1144 = vunpack.c.l.b16 %v1121
    %v1145 = vunpack.c.l.b16 %v1122
    %v1146 = vunpack.c.l.b16 %v1123
    %v1147 = vunpack.c.l.b16 %v1124
    %v1148 = vunpack.c.l.b16 %v1125
    %v1149 = vunpack.c.l.b16 %v1126
    %v1150 = vpack.c.b16 %v1143, %v1142
    %v1151 = vpack.c.b16 %v1145, %v1144
    %v1152 = vpack.c.b16 %v1147, %v1146
    %v1153 = vpack.c.b16 %v1149, %v1148
    %vm1158 = vcmask 523264
    %v1160 = vsel %vm1158, %v1118, 0
    %1162 = vmatprep.subr.bf16.mxu0 0
    %1163 = vmatpush1.bf16.msra.mxu0 %v1150
    %1164 = vmatprep.subr.bf16.mxu0 0
    %1165 = vmatpush1.bf16.msra.mxu0 %v1151
    %1166 = vmatprep.subr.bf16.mxu0 0
    %1167 = vmatpush1.bf16.msra.mxu0 %v1152
    %1168 = vmatprep.subr.bf16.mxu0 0
    %1169 = vmatpush1.bf16.msra.mxu0 %v1153
    %1170 = vmatprep.subr.bf16.mxu0 0
    %1171 = vmatpush1.bf16.msra.mxu0 0
    %1172 = vmatprep.subr.bf16.mxu0 0
    %1173 = vmatpush1.bf16.msra.mxu0 0
    %1174 = vmatprep.subr.bf16.mxu0 0
    %1175 = vmatpush1.bf16.msra.mxu0 0
    %1176 = vmatprep.subr.bf16.mxu0 0
    %1177 = vmatpush1.bf16.msra.mxu0 0
    %1178 = vmatprep.subr.bf16.mxu0 0
    %1179 = vmatpush1.bf16.msra.mxu0 0
    %1180 = vmatprep.subr.bf16.mxu0 0
    %1181 = vmatpush1.bf16.msra.mxu0 0
    %1182 = vmatprep.subr.bf16.mxu0 0
    %1183 = vmatpush1.bf16.msra.mxu0 0
    %1184 = vmatprep.subr.bf16.mxu0 0
    %1185 = vmatpush1.bf16.msra.mxu0 0
    %1186 = vmatprep.subr.bf16.mxu0 0
    %1187 = vmatpush1.bf16.msra.mxu0 0
    %1188 = vmatprep.subr.bf16.mxu0 0
    %1189 = vmatpush1.bf16.msra.mxu0 0
    %1190 = vmatprep.subr.bf16.mxu0 0
    %1191 = vmatpush1.bf16.msra.mxu0 0
    %1192 = vmatprep.subr.bf16.mxu0 0
    %1193 = vmatpush1.bf16.msra.mxu0 0
    %1194 = vmatprep.mubr.bf16.mxu0 0
    %1195 = vmatmul.mubr.bf16.gmra.mrb[0].mxu0 %v1160
    %v1196 = vpop.f32.mrb[0].mxu0
    %v1197 = vadd.f32 %v1132, %v1196
    %v1198 = vpop.f32.mrb[0].mxu0
    %v1199 = vpop.f32.mrb[0].mxu0
    %v1200 = vpop.f32.mrb[0].mxu0
    %1201 = vdwg.mxu0
    %1202 = vst [vmem:[#allocation2] sm:$0x3] %v1197
    // Predicated region
    $region38: #{cnn_forward.1} parent=1 // pred_check
      _
    $region39: #{cnn_forward.1} parent=1 // pred_check_branch
      %1204 = sbr.rel (0) target = $region41
    $region40: #{cnn_forward.1} parent=1 // pred_region
      %s1206 = ssub.s32 32, 32
      %1207 = vsyncadd [#allocation3], %s1206
      %s1209 = sshll.u32 [#allocation2], 4
      %s1210 = int_to_ptr.vmem [resolvable:$true] %s1209
      %1212 = dma.vmem_to_hbm [thread:$0]  %s1210, 32, %s9, [#allocation3]
    $region41: #{cnn_forward.1} parent=1 // pred_fallthru
      _
    // Predicated region
    $region42: #{cnn_forward.1} parent=1 // pred_check
      _
    $region43: #{cnn_forward.1} parent=1 // pred_check_branch
      %1214 = sbr.rel (0) target = $region45
    $region44: #{cnn_forward.1} parent=1 // pred_region
      %1215 = dma.done [#allocation3], 32
    $region45: #{cnn_forward.1} parent=1 // pred_fallthru
      _
    %1216 = vsyncpa [#allocation3], 1

</llo_original>
